<compile_context>
chip_gen: v6e
topology: v6e:2x2x1
jax: 0.10.0
libtpu: 0.0.40
codegen_flags: <defaults>
</compile_context>

<pallas_src>
import functools

import jax
import jax.numpy as jnp
import numpy as np
from jax.experimental import pallas as pl
from jax.experimental.pallas import tpu as pltpu


def _round_up(x, m):
    return ((x + m - 1) // m) * m


# Keep (in + out) double-buffered block traffic comfortably under the default
# scoped-VMEM limit on every generation (v5e: 16 MiB, v6e/v7x: 32 MiB).
_VMEM_DATA_BUDGET = 12 * 1024 * 1024  # bytes, budget for 4 * block_bytes


# ---------------------------------------------------------------------------
# Kernels (the reduction + affine hot path lives here)
# ---------------------------------------------------------------------------

def _ln_channels_last_kernel(x_ref, w_ref, b_ref, o_ref, *, eps, inv_c):
    # x_ref: (tile_rows, C); w_ref/b_ref: (1, C). Normalize across C (lane axis).
    x = x_ref[...].astype(jnp.float32)
    mean = jnp.sum(x, axis=-1, keepdims=True) * inv_c
    mean_sq = jnp.sum(x * x, axis=-1, keepdims=True) * inv_c
    var = mean_sq - mean * mean                      # one-pass biased variance
    inv = jax.lax.rsqrt(var + eps)
    y = (x - mean) * inv * w_ref[...] + b_ref[...]
    o_ref[...] = y.astype(o_ref.dtype)


def _ln_channels_first_kernel(x_ref, w_ref, b_ref, o_ref, *, eps, inv_c):
    # x_ref: (1, C, thw); w_ref/b_ref: (1, C, 1). Normalize across C (sublanes),
    # spatial tile is the lane-dense last dim (multiple of 128).
    x = x_ref[...].astype(jnp.float32)
    mean = jnp.sum(x, axis=1, keepdims=True) * inv_c
    mean_sq = jnp.sum(x * x, axis=1, keepdims=True) * inv_c
    var = mean_sq - mean * mean                      # one-pass biased variance
    inv = jax.lax.rsqrt(var + eps)
    y = w_ref[...] * ((x - mean) * inv) + b_ref[...]
    o_ref[...] = y.astype(o_ref.dtype)


# ---------------------------------------------------------------------------
# Wrappers (reshape / pad / parameter shaping stay in plain JAX)
# ---------------------------------------------------------------------------

def layer_norm_channels_last(x, weight, bias, eps=1e-6, block_rows=1024):
    """F.layer_norm over the last dim of x; weight/bias shape (C,)."""
    C = x.shape[-1]
    lead = x.shape[:-1]
    R = int(np.prod(lead)) if lead else 1
    x2 = x.reshape(R, C)
    w2 = weight.reshape(1, C).astype(jnp.float32)
    b2 = bias.reshape(1, C).astype(jnp.float32)

    # Row tile: as large as possible under the VMEM budget, multiple of 8,
    # never larger than the 8-aligned row count.
    max_tr = max(8, _VMEM_DATA_BUDGET // (16 * max(C, 1)))  # 4 bufs * tr * C * 4B
    tr = min(block_rows, max_tr)
    tr = max(8, (tr // 8) * 8)
    tr = min(tr, _round_up(R, 8))

    # Pad rows up to a multiple of the tile (zero rows are harmless: the per-row
    # reduction never mixes rows, and padded outputs are sliced off).
    R_pad = _round_up(R, tr)
    if R_pad != R:
        x2 = jnp.pad(x2, ((0, R_pad - R), (0, 0)))

    out = pl.pallas_call(
        functools.partial(_ln_channels_last_kernel, eps=eps, inv_c=1.0 / C),
        out_shape=jax.ShapeDtypeStruct((R_pad, C), x.dtype),
        grid=(R_pad // tr,),
        in_specs=[
            pl.BlockSpec((tr, C), lambda i: (i, 0)),
            pl.BlockSpec((1, C), lambda i: (0, 0)),
            pl.BlockSpec((1, C), lambda i: (0, 0)),
        ],
        out_specs=pl.BlockSpec((tr, C), lambda i: (i, 0)),
        compiler_params=pltpu.CompilerParams(dimension_semantics=("parallel",)),
    )(x2, w2, b2)

    if R_pad != R:
        out = out[:R]
    return out.reshape(*lead, C)


def layer_norm_channels_first(x, weight, bias, eps=1e-6, max_spatial_tile=2048):
    """ConvNeXt channels_first LayerNorm: normalize across axis 1 of
    (B, C, *spatial). Spatial dims are flattened to a lane-dense HW axis."""
    B, C = x.shape[0], x.shape[1]
    spatial = x.shape[2:]
    HW = int(np.prod(spatial)) if spatial else 1
    x3 = x.reshape(B, C, HW)
    w3 = weight.reshape(1, C, 1).astype(jnp.float32)
    b3 = bias.reshape(1, C, 1).astype(jnp.float32)

    # Pad the spatial axis to a multiple of 128 lanes (padded columns are zeros;
    # the reduction is over C only, so they never contaminate valid outputs).
    HW_pad = _round_up(HW, 128)

    # Spatial tile: largest multiple of 128 that divides HW_pad and respects the
    # VMEM budget (4 * C * thw * 4 B for in+out double-buffered blocks).
    cap = max(128, _VMEM_DATA_BUDGET // (16 * max(C, 1)))
    cap = min(cap, max_spatial_tile, HW_pad)
    thw = 128
    for cand in range(128, cap + 1, 128):
        if HW_pad % cand == 0:
            thw = cand

    if HW_pad != HW:
        x3 = jnp.pad(x3, ((0, 0), (0, 0), (0, HW_pad - HW)))

    out = pl.pallas_call(
        functools.partial(_ln_channels_first_kernel, eps=eps, inv_c=1.0 / C),
        out_shape=jax.ShapeDtypeStruct((B, C, HW_pad), x.dtype),
        grid=(B, HW_pad // thw),
        in_specs=[
            pl.BlockSpec((1, C, thw), lambda b, j: (b, 0, j)),
            pl.BlockSpec((1, C, 1), lambda b, j: (0, 0, 0)),
            pl.BlockSpec((1, C, 1), lambda b, j: (0, 0, 0)),
        ],
        out_specs=pl.BlockSpec((1, C, thw), lambda b, j: (b, 0, j)),
        compiler_params=pltpu.CompilerParams(
            dimension_semantics=("parallel", "parallel")),
    )(x3, w3, b3)

    if HW_pad != HW:
        out = out[:, :, :HW]
    return out.reshape(B, C, *spatial)


class LayerNormPallas:
    """Mirrors the PyTorch module's constructor arguments / forward semantics."""

    def __init__(self, normalized_shape, dim=2, eps=1e-6,
                 data_format="channels_last", reshape_last_to_first=False):
        if data_format not in ("channels_last", "channels_first"):
            raise NotImplementedError
        self.C = int(normalized_shape)
        # Module init: weight = ones, bias = zeros. Use deterministic non-trivial
        # values so the affine/broadcast path is actually exercised.
        self.weight = (jnp.ones((self.C,), jnp.float32)
                       + 0.1 * jnp.arange(self.C, dtype=jnp.float32))
        self.bias = 0.01 * jnp.arange(self.C, dtype=jnp.float32)
        self.eps = eps
        self.data_format = data_format
        self.dim = dim
        self.reshape_last_to_first = reshape_last_to_first

    def __call__(self, x):
        if self.data_format == "channels_last":
            return layer_norm_channels_last(x, self.weight, self.bias, self.eps)
        # channels_first: normalize across axis 1.
        if x.ndim == 2:
            # dim==1 case: axis 1 is also the last axis -> same math/kernel.
            return layer_norm_channels_last(x, self.weight, self.bias, self.eps)
        # dim==2 (NCHW) and dim==3 (NCDHW) both reduce over axis 1 with the
        # weight/bias broadcast over all trailing spatial dims.
        return layer_norm_channels_first(x, self.weight, self.bias, self.eps)


# ---------------------------------------------------------------------------
# Pure-JAX references for verification
# ---------------------------------------------------------------------------

def _ref_channels_first(x, w, b, eps):
    u = x.mean(1, keepdims=True)
    s = ((x - u) ** 2).mean(1, keepdims=True)
    xhat = (x - u) / jnp.sqrt(s + eps)
    wb = w.reshape((1, -1) + (1,) * (x.ndim - 2))
    bb = b.reshape((1, -1) + (1,) * (x.ndim - 2))
    return wb * xhat + bb


def _ref_channels_last(x, w, b, eps):
    u = x.mean(-1, keepdims=True)
    s = ((x - u) ** 2).mean(-1, keepdims=True)
    xhat = (x - u) / jnp.sqrt(s + eps)
    return xhat * w + b


if __name__ == "__main__":
    key = jax.random.PRNGKey(0)
    k1, k2, k3, k4 = jax.random.split(key, 4)

    B, C, H, W = 2, 4, 16, 16

    # channels_first: NCHW input (PyTorch conv layout)
    x_cf = jax.random.normal(k1, (B, C, H, W), dtype=jnp.float32)
    ln_cf = LayerNormPallas(C, dim=2, data_format="channels_first")
    y_cf = jax.block_until_ready(ln_cf(x_cf))
    y_cf_ref = _ref_channels_first(x_cf, ln_cf.weight, ln_cf.bias, ln_cf.eps)
    np.testing.assert_allclose(np.asarray(y_cf), np.asarray(y_cf_ref),
                               rtol=1e-5, atol=1e-4)

    # channels_last: NHWC input
    x_cl = jax.random.normal(k2, (B, H, W, C), dtype=jnp.float32)
    ln_cl = LayerNormPallas(C, data_format="channels_last")
    y_cl = jax.block_until_ready(ln_cl(x_cl))
    y_cl_ref = _ref_channels_last(x_cl, ln_cl.weight, ln_cl.bias, ln_cl.eps)
    np.testing.assert_allclose(np.asarray(y_cl), np.asarray(y_cl_ref),
                               rtol=1e-5, atol=1e-4)

    # Ragged tails (exercise the pad/slice paths on both kernels).
    x_cl_odd = jax.random.normal(k3, (3, 7, 5, C), dtype=jnp.float32)  # R=105
    y_cl_odd = jax.block_until_ready(ln_cl(x_cl_odd))
    np.testing.assert_allclose(
        np.asarray(y_cl_odd),
        np.asarray(_ref_channels_last(x_cl_odd, ln_cl.weight, ln_cl.bias, ln_cl.eps)),
        rtol=1e-5, atol=1e-4)

    x_cf_odd = jax.random.normal(k4, (B, C, 14, 14), dtype=jnp.float32)  # HW=196
    y_cf_odd = jax.block_until_ready(ln_cf(x_cf_odd))
    np.testing.assert_allclose(
        np.asarray(y_cf_odd),
        np.asarray(_ref_channels_first(x_cf_odd, ln_cf.weight, ln_cf.bias, ln_cf.eps)),
        rtol=1e-5, atol=1e-4)

    print("KERNEL_OK")
</pallas_src>

<mosaic_0001>
module attributes {stable_mosaic.version = 11 : i64} {
  func.func @_ln_channels_first_kernel(%arg0: i32, %arg1: i32, %arg2: memref<1x4x256xf32, #tpu.memory_space<vmem>>, %arg3: memref<1x4x1xf32, #tpu.memory_space<vmem>>, %arg4: memref<1x4x1xf32, #tpu.memory_space<vmem>>, %arg5: memref<1x4x256xf32, #tpu.memory_space<vmem>>) attributes {dimension_semantics = [#tpu.dimension_semantics<parallel>, #tpu.dimension_semantics<parallel>], iteration_bounds = array<i64: 2, 1>, scalar_prefetch = 0 : i64, scratch_operands = 0 : i64, tpu.core_type = #tpu.core_type<tc>, window_params = [{transform_indices = @transform_0, window_bounds = array<i64: 1, 4, 256>}, {pipeline_mode = #tpu.pipeline_mode<synchronous>, transform_indices = @transform_1, window_bounds = array<i64: 1, 4, 1>}, {pipeline_mode = #tpu.pipeline_mode<synchronous>, transform_indices = @transform_2, window_bounds = array<i64: 1, 4, 1>}, {transform_indices = @transform_3, window_bounds = array<i64: 1, 4, 256>}]} {
    %c0 = arith.constant 0 : index
    %c0_0 = arith.constant 0 : index
    %c0_1 = arith.constant 0 : index
    %0 = vector.load %arg2[%c0, %c0_0, %c0_1] : memref<1x4x256xf32, #tpu.memory_space<vmem>>, vector<1x4x256xf32>
    %cst = arith.constant dense<0.000000e+00> : vector<1x256xf32>
    %1 = vector.multi_reduction <add>, %0, %cst [1] : vector<1x4x256xf32> to vector<1x256xf32>
    %2 = vector.shape_cast %1 : vector<1x256xf32> to vector<1x1x256xf32>
    %cst_2 = arith.constant 2.500000e-01 : f32
    %3 = vector.broadcast %cst_2 : f32 to vector<1x1x256xf32>
    %4 = arith.mulf %2, %3 : vector<1x1x256xf32>
    %5 = arith.mulf %0, %0 : vector<1x4x256xf32>
    %cst_3 = arith.constant dense<0.000000e+00> : vector<1x256xf32>
    %6 = vector.multi_reduction <add>, %5, %cst_3 [1] : vector<1x4x256xf32> to vector<1x256xf32>
    %7 = vector.shape_cast %6 : vector<1x256xf32> to vector<1x1x256xf32>
    %cst_4 = arith.constant 2.500000e-01 : f32
    %8 = vector.broadcast %cst_4 : f32 to vector<1x1x256xf32>
    %9 = arith.mulf %7, %8 : vector<1x1x256xf32>
    %10 = arith.mulf %4, %4 : vector<1x1x256xf32>
    %11 = arith.subf %9, %10 : vector<1x1x256xf32>
    %cst_5 = arith.constant 9.99999997E-7 : f32
    %12 = vector.broadcast %cst_5 : f32 to vector<1x1x256xf32>
    %13 = arith.addf %11, %12 : vector<1x1x256xf32>
    %14 = math.rsqrt %13 : vector<1x1x256xf32>
    %c0_6 = arith.constant 0 : index
    %c0_7 = arith.constant 0 : index
    %c0_8 = arith.constant 0 : index
    %15 = vector.load %arg3[%c0_6, %c0_7, %c0_8] : memref<1x4x1xf32, #tpu.memory_space<vmem>>, vector<1x4x1xf32>
    %16 = vector.broadcast %4 : vector<1x1x256xf32> to vector<1x4x256xf32>
    %17 = arith.subf %0, %16 : vector<1x4x256xf32>
    %18 = vector.broadcast %14 : vector<1x1x256xf32> to vector<1x4x256xf32>
    %19 = arith.mulf %17, %18 : vector<1x4x256xf32>
    %20 = vector.broadcast %15 : vector<1x4x1xf32> to vector<1x4x256xf32>
    %21 = arith.mulf %20, %19 : vector<1x4x256xf32>
    %c0_9 = arith.constant 0 : index
    %c0_10 = arith.constant 0 : index
    %c0_11 = arith.constant 0 : index
    %22 = vector.load %arg4[%c0_9, %c0_10, %c0_11] : memref<1x4x1xf32, #tpu.memory_space<vmem>>, vector<1x4x1xf32>
    %23 = vector.broadcast %22 : vector<1x4x1xf32> to vector<1x4x256xf32>
    %24 = arith.addf %21, %23 : vector<1x4x256xf32>
    %c0_12 = arith.constant 0 : index
    %c0_13 = arith.constant 0 : index
    %c0_14 = arith.constant 0 : index
    %25 = vector.load %arg5[%c0_12, %c0_13, %c0_14] : memref<1x4x256xf32, #tpu.memory_space<vmem>>, vector<1x4x256xf32>
    tpu.vector_store %arg5[%c0_12, %c0_13, %c0_14], %24 {strides = array<i32>} : memref<1x4x256xf32, #tpu.memory_space<vmem>>, vector<1x4x256xf32>,
    return
  }
  func.func @transform_0(%arg0: i32, %arg1: i32) -> (i32, i32, i32) {
    %c0_i32 = arith.constant 0 : i32
    %c0_i32_0 = arith.constant 0 : i32
    return %arg0, %c0_i32, %arg1 : i32, i32, i32
  }
  func.func @transform_1(%arg0: i32, %arg1: i32) -> (i32, i32, i32) {
    %c0_i32 = arith.constant 0 : i32
    %c0_i32_0 = arith.constant 0 : i32
    %c0_i32_1 = arith.constant 0 : i32
    %c0_i32_2 = arith.constant 0 : i32
    return %c0_i32, %c0_i32_0, %c0_i32_1 : i32, i32, i32
  }
  func.func @transform_2(%arg0: i32, %arg1: i32) -> (i32, i32, i32) {
    %c0_i32 = arith.constant 0 : i32
    %c0_i32_0 = arith.constant 0 : i32
    %c0_i32_1 = arith.constant 0 : i32
    %c0_i32_2 = arith.constant 0 : i32
    return %c0_i32, %c0_i32_0, %c0_i32_1 : i32, i32, i32
  }
  func.func @transform_3(%arg0: i32, %arg1: i32) -> (i32, i32, i32) {
    %c0_i32 = arith.constant 0 : i32
    %c0_i32_0 = arith.constant 0 : i32
    return %arg0, %c0_i32, %arg1 : i32, i32, i32
  }
}

</mosaic_0001>

<llo_original>
// kernel: tpu_custom_call.1
$region0: #{tpu_custom_call.1}
  #allocation0 [shape = 'u32[]', space=smem, size = 0x4, offset = 0x4, fixed_abs, tag = 'smem constant byte address 0x4 - core index']
  #allocation1 [shape = 'u32[144,128]{1,0:T(1,128)}', space=vmem, size = 0x12000, scoped, tag = 'internal scratch']
  %s0 = inlined_call_operand.hbm [shape: f32[2,4,256], index: 0, kind: input, shape index: {}]
  %s1 = inlined_call_operand.vmem [shape: f32[1,4,1], index: 1, kind: input, shape index: {}]
  %s2 = inlined_call_operand.vmem [shape: f32[1,4,1], index: 2, kind: input, shape index: {}]
  %s3 = inlined_call_operand.hbm [shape: f32[2,4,256], index: 3, kind: output, shape index: {}]
  %s4 = sld [smem:[#allocation0]]
  $region49: #{tpu_custom_call.1} parent=0
    _
  %s6 = ssub.s32 1, %s4
  %s7 = scalar_select 0, %s6, %s4
  $region1: #{tpu_custom_call.1} parent=0
    #allocation2 [shape = 'u8[8192]{0}', space=vmem, size = 0x2000, scoped, tag = 'input window, operand 0']
    #allocation3 [shape = 's32[2]{0}', space=sflag, size = 0x8, scoped, tag = 'scoped memory for tpu_custom_call.1']
    #allocation4 [shape = 's32[2]{0}', space=sflag, size = 0x8, scoped, tag = 'scoped memory for tpu_custom_call.1']
    #allocation5 [shape = 'u8[8192]{0}', space=vmem, size = 0x2000, scoped, tag = 'output window, operand 0']
    %8 = vsyncpa [#allocation3], 0
    %s9 = scalar_lea.sflag [#allocation3], 1
    %10 = vsyncpa %s9, 0
    %11 = vsyncpa [#allocation4], 0
    %s12 = scalar_lea.sflag [#allocation4], 1
    %13 = vsyncpa %s12, 0
    loop: start=0, step=1, limit=4
    $region2: #{tpu_custom_call.1} parent=1 // loop_pre_header
      _
    $region3: #{tpu_custom_call.1} parent=1 // loop_header
      %s15 = sphi 0, %s19
      %p16 = scmp.ge.s32.totalorder %s15, 4
      %s22 = sphi 0, %s34
      %s23 = sphi 0, %s30
      %s24 = sphi 0, %s22
      %s25 = sphi 0, %s23
      %s26 = sphi 0, %s24
      %s27 = sphi 0, %s25
      %s39 = sphi 0, %s41
      %s42 = sphi 0, %s39
      %s43 = sphi 0, %s42
      %s59 = sphi 0, %s43
      %s63 = sphi 0, %s63
      %s65 = sphi 0, %s63
      %s66 = sphi 0, %s65
      %s80 = sphi 0, %s66
      %s84 = sphi 0, %s84
      %s86 = sphi 0, %s84
      %s87 = sphi 0, %s86
      %s101 = sphi 0, %s87
      %s109 = sphi 0, %s111
      %s112 = sphi 0, %s109
      %s113 = sphi 0, %s112
      %s129 = sphi 0, %s113
    $region4: #{tpu_custom_call.1} parent=1 // loop_header_branch
      %18 = sbr.rel (%p16) target = $region8
    $region5: #{tpu_custom_call.1} parent=1 // loop_body
      %s20 = ssub.s32 %s15, 1
      %s21 = ssub.s32 %s15, 2
      %s28 = sadd.s32 1, %s23
      %p29 = scmp.ge.s32.totalorder %s28, 1
      %s30 = scalar_select %p29, 0, %s28
      %s31 = sadd.s32 1, %s22
      %s32 = scalar_select %p29, %s31, %s22
      %p33 = scmp.ge.s32.totalorder %s32, 2
      %s34 = scalar_select %p33, 0, %s32
      %s35 = ssub.s32 %s22, %s34
      %s36 = ssub.s32 %s23, %s30
      %s37 = sor.u32 %s35, %s36
      %p38 = scmp.eq.s32.totalorder %s37, 0
      %s40 = sadd.s32 %s39, 1
      %s41 = scalar_select %p38, %s39, %s40
      %p44 = pneg %p38
      %p45 = scmp.eq.s32.totalorder %s15, 1
      %p46 = por %p44, %p45
      %p47 = scmp.ne.s32.totalorder %s39, %s42
      %p48 = scmp.eq.s32.totalorder %s15, 0
      %p49 = por %p47, %p48
      %p50 = scmp.ne.s32.totalorder %s39, %s42
      %p51 = scmp.eq.s32.totalorder %s20, 1
      %p52 = por %p50, %p51
      %p53 = scmp.ne.s32.totalorder %s42, %s43
      %p54 = scmp.eq.s32.totalorder %s20, 0
      %p55 = por %p53, %p54
      %p56 = scmp.ne.s32.totalorder %s42, %s43
      %p57 = scmp.eq.s32.totalorder %s21, 1
      %p58 = por %p56, %p57
      %p60 = scmp.ne.s32.totalorder %s43, %s59
      %p61 = scmp.eq.s32.totalorder %s21, 0
      %p62 = por %p60, %p61
      %s64 = sadd.s32 %s63, 1
      %p67 = scmp.eq.s32.totalorder %s15, 1
      %p68 = scmp.ne.s32.totalorder %s63, %s65
      %p69 = scmp.eq.s32.totalorder %s15, 0
      %p70 = por %p68, %p69
      %p71 = scmp.ne.s32.totalorder %s63, %s65
      %p72 = scmp.eq.s32.totalorder %s20, 1
      %p73 = por %p71, %p72
      %p74 = scmp.ne.s32.totalorder %s65, %s66
      %p75 = scmp.eq.s32.totalorder %s20, 0
      %p76 = por %p74, %p75
      %p77 = scmp.ne.s32.totalorder %s65, %s66
      %p78 = scmp.eq.s32.totalorder %s21, 1
      %p79 = por %p77, %p78
      %p81 = scmp.ne.s32.totalorder %s66, %s80
      %p82 = scmp.eq.s32.totalorder %s21, 0
      %p83 = por %p81, %p82
      %s85 = sadd.s32 %s84, 1
      %p88 = scmp.eq.s32.totalorder %s15, 1
      %p89 = scmp.ne.s32.totalorder %s84, %s86
      %p90 = scmp.eq.s32.totalorder %s15, 0
      %p91 = por %p89, %p90
      %p92 = scmp.ne.s32.totalorder %s84, %s86
      %p93 = scmp.eq.s32.totalorder %s20, 1
      %p94 = por %p92, %p93
      %p95 = scmp.ne.s32.totalorder %s86, %s87
      %p96 = scmp.eq.s32.totalorder %s20, 0
      %p97 = por %p95, %p96
      %p98 = scmp.ne.s32.totalorder %s86, %s87
      %p99 = scmp.eq.s32.totalorder %s21, 1
      %p100 = por %p98, %p99
      %p102 = scmp.ne.s32.totalorder %s87, %s101
      %p103 = scmp.eq.s32.totalorder %s21, 0
      %p104 = por %p102, %p103
      %s105 = ssub.s32 %s22, %s34
      %s106 = ssub.s32 %s23, %s30
      %s107 = sor.u32 %s105, %s106
      %p108 = scmp.eq.s32.totalorder %s107, 0
      %s110 = sadd.s32 %s109, 1
      %s111 = scalar_select %p108, %s109, %s110
      %p114 = pneg %p108
      %p115 = scmp.eq.s32.totalorder %s15, 1
      %p116 = por %p114, %p115
      %p117 = scmp.ne.s32.totalorder %s109, %s112
      %p118 = scmp.eq.s32.totalorder %s15, 0
      %p119 = por %p117, %p118
      %p120 = scmp.ne.s32.totalorder %s109, %s112
      %p121 = scmp.eq.s32.totalorder %s20, 1
      %p122 = por %p120, %p121
      %p123 = scmp.ne.s32.totalorder %s112, %s113
      %p124 = scmp.eq.s32.totalorder %s20, 0
      %p125 = por %p123, %p124
      %p126 = scmp.ne.s32.totalorder %s112, %s113
      %p127 = scmp.eq.s32.totalorder %s21, 1
      %p128 = por %p126, %p127
      %p130 = scmp.ne.s32.totalorder %s113, %s129
      %p131 = scmp.eq.s32.totalorder %s21, 0
      %p132 = por %p130, %p131
      %p133 = scmp.le.s32.totalorder 1, %s15
      %p134 = scmp.lt.s32.totalorder %s15, 3
      %p135 = pnand %p133, %p134
      %p136 = pneg %p135
      // Predicated region
      $region9: #{tpu_custom_call.1} parent=5 // pred_check
        _
      $region10: #{tpu_custom_call.1} parent=5 // pred_check_branch
        %138 = sbr.rel (%p135) target = $region12
      $region11: #{tpu_custom_call.1} parent=5 // pred_region
        %s139 = ssub.s32 %s15, 1
        // Predicated region
        $region13: #{tpu_custom_call.1} parent=11 // pred_check
          %p140 = pneg %p76
        $region14: #{tpu_custom_call.1} parent=11 // pred_check_branch
          %142 = sbr.rel (%p140) target = $region16
        $region15: #{tpu_custom_call.1} parent=11 // pred_region
          _
        $region16: #{tpu_custom_call.1} parent=11 // pred_fallthru
          _
        // Predicated region
        $region17: #{tpu_custom_call.1} parent=11 // pred_check
          %p143 = pneg %p97
        $region18: #{tpu_custom_call.1} parent=11 // pred_check_branch
          %145 = sbr.rel (%p143) target = $region20
        $region19: #{tpu_custom_call.1} parent=11 // pred_region
          _
        $region20: #{tpu_custom_call.1} parent=11 // pred_fallthru
          _
      $region12: #{tpu_custom_call.1} parent=5 // pred_fallthru
        _
      %p146 = scmp.lt.s32.totalorder %s15, 2
      // Predicated region
      $region21: #{tpu_custom_call.1} parent=5 // pred_check
        %p147 = pneg %p146
      $region22: #{tpu_custom_call.1} parent=5 // pred_check_branch
        %149 = sbr.rel (%p147) target = $region24
      $region23: #{tpu_custom_call.1} parent=5 // pred_region
        // Predicated region
        $region25: #{tpu_custom_call.1} parent=23 // pred_check
          %p150 = pneg %p49
        $region26: #{tpu_custom_call.1} parent=23 // pred_check_branch
          %152 = sbr.rel (%p150) target = $region28
        $region27: #{tpu_custom_call.1} parent=23 // pred_region
          %s153 = sand.u32 %s39, 1
          %s154 = scalar_lea.sflag [#allocation3], %s153
          %s155 = sand.u32 %s39, 1
          %s156 = smul.addr %s155, 8
          %s157 = scalar_lea.vmem [#allocation2], %s156
          %s158 = smul.u32 2, %s23
          %s160 = ssub.s32 128, 128
          %161 = vsyncadd %s154, %s160
          %s162 = smul.addr %s22, 2
          %s163 = sadd.s32 %s158, %s162
          %s164 = smul.addr %s163, 64
          %s165 = scalar_lea.hbm %s0, %s164
          %s167 = sshll.u32 %s157, 4
          %s168 = int_to_ptr.vmem [resolvable:$true] %s167
          %170 = dma.hbm_to_vmem [thread:$0]  %s165, 128, %s168, %s154
        $region28: #{tpu_custom_call.1} parent=23 // pred_fallthru
          _
      $region24: #{tpu_custom_call.1} parent=5 // pred_fallthru
        _
      %p171 = scmp.le.s32.totalorder 1, %s15
      %p172 = scmp.lt.s32.totalorder %s15, 3
      %p173 = pnand %p171, %p172
      %p174 = pneg %p173
      // Predicated region
      $region29: #{tpu_custom_call.1} parent=5 // pred_check
        _
      $region30: #{tpu_custom_call.1} parent=5 // pred_check_branch
        %176 = sbr.rel (%p173) target = $region32
      $region31: #{tpu_custom_call.1} parent=5 // pred_region
        %s177 = ssub.s32 %s15, 1
        %s178 = sand.u32 %s42, 1
        %s179 = scalar_lea.sflag [#allocation3], %s178
        %s180 = sand.u32 %s42, 1
        %s181 = smul.addr %s180, 8
        %s182 = scalar_lea.vmem [#allocation2], %s181
        // Predicated region
        $region33: #{tpu_custom_call.1} parent=31 // pred_check
          %p183 = pneg %p55
        $region34: #{tpu_custom_call.1} parent=31 // pred_check_branch
          %185 = sbr.rel (%p183) target = $region36
        $region35: #{tpu_custom_call.1} parent=31 // pred_region
          %186 = dma.done %s179, 128
        $region36: #{tpu_custom_call.1} parent=31 // pred_fallthru
          _
        %s187 = sand.u32 %s42, 1
        %s188 = scalar_lea.sflag [#allocation3], %s187
        %s189 = sand.u32 %s42, 1
        %s190 = smul.addr %s189, 8
        %s191 = scalar_lea.vmem [#allocation2], %s190
        %p192 = pneg %p55
        %p193 = pneg %p52
        %p194 = pneg %p76
        %p195 = pneg %p73
        %p196 = pneg %p97
        %p197 = pneg %p94
        %p198 = pneg %p125
        %p199 = pneg %p122
        %s200 = sand.u32 %s112, 1
        %s201 = scalar_lea.sflag [#allocation4], %s200
        %s202 = sand.u32 %s112, 1
        %s203 = smul.addr %s202, 8
        %s204 = scalar_lea.vmem [#allocation5], %s203
        %s205 = smul.u32 2, %s25
        %s206 = smul.u32 2, %s25
        %v207 = vld [vmem:[%s182] sm:$0xff]
        %v209 = vcombine.high %v207, %v207
        %vm211 = vcmask 1043456
        %v212 = vsel %vm211, %v207, 0.0
        %v213 = vrot.slane %v212, 4
        %v214 = vadd.f32 %v212, %v213
        %v215 = vrot.slane %v214, 2
        %v216 = vadd.f32 %v214, %v215
        %v217 = vrot.slane %v216, 1
        %v218 = vadd.f32 %v216, %v217
        %v219 = vsel %vm211, %v209, 0.0
        %v220 = vrot.slane %v219, 4
        %v221 = vadd.f32 %v219, %v220
        %v222 = vrot.slane %v221, 2
        %v223 = vadd.f32 %v221, %v222
        %v224 = vrot.slane %v223, 1
        %v225 = vadd.f32 %v223, %v224
        %v226 = vmul.f32 %v218, 0.25
        %v227 = vmul.f32 %v225, 0.25
        %v228 = vmul.f32 %v207, %v207
        %v230 = vcombine.high %v228, %v228
        %v232 = vsel %vm211, %v228, 0.0
        %v233 = vrot.slane %v232, 4
        %v234 = vadd.f32 %v232, %v233
        %v235 = vrot.slane %v234, 2
        %v236 = vadd.f32 %v234, %v235
        %v237 = vrot.slane %v236, 1
        %v238 = vadd.f32 %v236, %v237
        %v239 = vsel %vm211, %v230, 0.0
        %v240 = vrot.slane %v239, 4
        %v241 = vadd.f32 %v239, %v240
        %v242 = vrot.slane %v241, 2
        %v243 = vadd.f32 %v241, %v242
        %v244 = vrot.slane %v243, 1
        %v245 = vadd.f32 %v243, %v244
        %v246 = vmul.f32 %v238, 0.25
        %v247 = vmul.f32 %v245, 0.25
        %v248 = vmul.f32 %v226, %v226
        %v249 = vmul.f32 %v227, %v227
        %v250 = vsub.f32 %v246, %v248
        %v251 = vsub.f32 %v247, %v249
        %v252 = vadd.f32 %v250, 1e-06
        %v253 = vadd.f32 %v251, 1e-06
        %v254 = vrsqrt.pop %v252
        %v255 = vrsqrt.pop %v253
        %v256 = vld [vmem:[%s1] sm:$0xf]
        %v259 = vcombine.low %v226, %v227
        %v261 = vsub.f32 %v207, %v259
        %v264 = vcombine.low %v254, %v255
        %v266 = vmul.f32 %v261, %v264
        %268 = vset.pattern.permute.xlu0 0
        %269 = vperm.xlu0 %268, %v256
        %v270 = vpop.permute.xlu0 %269
        %v273 = vcombine.high %v266, %v266
        %v275 = vmul.f32 %v270, %v266
        %v276 = vmul.f32 %v270, %v273
        %v277 = vld [vmem:[%s2] sm:$0xf]
        %279 = vset.pattern.permute.xlu0 0
        %280 = vperm.xlu0 %279, %v277
        %v281 = vpop.permute.xlu0 %280
        %v283 = vadd.f32 %v275, %v281
        %v284 = vadd.f32 %v276, %v281
        %v287 = vcombine.low %v283, %v284
        %289 = vst [vmem:[%s204] sm:$0xff] %v287
        %s290 = sand.u32 %s112, 1
        %s291 = scalar_lea.sflag [#allocation4], %s290
        %s292 = sand.u32 %s112, 1
        %s293 = smul.addr %s292, 8
        %s294 = scalar_lea.vmem [#allocation5], %s293
        // Predicated region
        $region37: #{tpu_custom_call.1} parent=31 // pred_check
          %p295 = pneg %p122
        $region38: #{tpu_custom_call.1} parent=31 // pred_check_branch
          %297 = sbr.rel (%p295) target = $region40
        $region39: #{tpu_custom_call.1} parent=31 // pred_region
          %s298 = smul.u32 2, %s25
          %s300 = ssub.s32 128, 128
          %301 = vsyncadd %s291, %s300
          %s302 = smul.addr %s24, 2
          %s303 = sadd.s32 %s298, %s302
          %s304 = smul.addr %s303, 64
          %s305 = scalar_lea.hbm %s3, %s304
          %s307 = sshll.u32 %s294, 4
          %s308 = int_to_ptr.vmem [resolvable:$true] %s307
          %310 = dma.vmem_to_hbm [thread:$0]  %s308, 128, %s305, %s291
        $region40: #{tpu_custom_call.1} parent=31 // pred_fallthru
          _
      $region32: #{tpu_custom_call.1} parent=5 // pred_fallthru
        _
      %p311 = scmp.le.s32.totalorder 2, %s15
      // Predicated region
      $region41: #{tpu_custom_call.1} parent=5 // pred_check
        %p312 = pneg %p311
      $region42: #{tpu_custom_call.1} parent=5 // pred_check_branch
        %314 = sbr.rel (%p312) target = $region44
      $region43: #{tpu_custom_call.1} parent=5 // pred_region
        %s315 = ssub.s32 %s15, 2
        // Predicated region
        $region45: #{tpu_custom_call.1} parent=43 // pred_check
          %p316 = pneg %p128
        $region46: #{tpu_custom_call.1} parent=43 // pred_check_branch
          %318 = sbr.rel (%p316) target = $region48
        $region47: #{tpu_custom_call.1} parent=43 // pred_region
          %s319 = sand.u32 %s113, 1
          %s320 = scalar_lea.sflag [#allocation4], %s319
          %s321 = sand.u32 %s113, 1
          %s322 = smul.addr %s321, 8
          %s323 = scalar_lea.vmem [#allocation5], %s322
          %324 = dma.done %s320, 128
        $region48: #{tpu_custom_call.1} parent=43 // pred_fallthru
          _
      $region44: #{tpu_custom_call.1} parent=5 // pred_fallthru
        _
    $region6: #{tpu_custom_call.1} parent=1 // loop_footer
      %s19 = sadd.s32 1, %s15
    $region7: #{tpu_custom_call.1} parent=1 // loop_footer_branch
      %14 = sbr.rel target = $region3
    $region8: #{tpu_custom_call.1} parent=1 // loop_exit
      _
    %325 = vsyncpa [#allocation3], 1
    %s326 = scalar_lea.sflag [#allocation3], 1
    %327 = vsyncpa %s326, 1
    %328 = vsyncpa [#allocation4], 1
    %s329 = scalar_lea.sflag [#allocation4], 1
    %330 = vsyncpa %s329, 1

</llo_original>
